<compile_context>
chip_gen: v6e
topology: v6e:2x2x1
jax: 0.10.0
libtpu: 0.0.40
codegen_flags: <defaults>
</compile_context>

<pallas_src>
import functools

import jax
import jax.numpy as jnp
from jax import lax
from jax.experimental import pallas as pl
from jax.experimental.pallas import tpu as pltpu


_MAX_BLOCK_BYTES = 3 * 1024 * 1024     # per x block; double-buffered x+y+W stays well under the limit
_VMEM_LIMIT_BYTES = 32 * 1024 * 1024   # explicit: v5e scoped default is 16 MiB, v7x physical is 64 MiB
_MAX_NB = 8                            # batch-group cap (whiten kernel statically unrolls over it)


# ----------------------------- Pallas kernels ------------------------------

def _moments_kernel(x_ref, pivot_ref, sum_ref, gram_ref, *, hw, tm, needs_mask):
    # x_ref: (nb, C, tm) in the input dtype; upcast in VMEM (halves HBM reads for bf16 inputs).
    xc = x_ref[...].astype(jnp.float32) - pivot_ref[...]            # (nb, C, tm) - (C, 1)
    if needs_mask:
        lane = lax.broadcasted_iota(jnp.int32, xc.shape, 2)
        xc = jnp.where(pl.program_id(1) * tm + lane < hw, xc, 0.0)  # zero the ragged tail lanes
    # Per-channel sums: lane reduce on the XLU (otherwise idle here), VPU adds over the batch group.
    sum_ref[...] = jnp.sum(jnp.sum(xc, axis=2, keepdims=True), axis=0)        # (C, 1)
    # Gram = sum_n xc[n] @ xc[n].T — batched dot contracting the lane dim (same structure as the
    # batched 'bqd,bkd->bqk' attention matmul; no explicit transpose materialized).
    # TODO(synk): verify in the MLIR dump that this lowers without a vxpose, and consider
    # precision=HIGHEST for the covariance matmul (free here since the pass is memory-bound).
    g = lax.dot_general(xc, xc, (((2,), (2,)), ((0,), (0,))),
                        preferred_element_type=jnp.float32)                   # (nb, C, C)
    gram_ref[...] = jnp.sum(g, axis=0)


def _whiten_kernel(x_ref, w_ref, beta_ref, y_ref):
    # y[n] = W @ x[n] + beta'   (mean already folded into beta' = beta - W @ mean)
    w = w_ref[...]
    beta = beta_ref[...]
    for n in range(x_ref.shape[0]):                    # static unroll; nb <= _MAX_NB
        xn = x_ref[n].astype(jnp.float32)              # (C, tm), upcast in VMEM
        yn = jnp.dot(w, xn, preferred_element_type=jnp.float32) + beta
        y_ref[n] = yn.astype(y_ref.dtype)


# ------------------------------ wrappers ------------------------------------

def _choose_tiles(N, C, HW, itemsize):
    """Pick (nb, tm, n_tiles) so each grid step moves a large, VMEM-safe block of x."""
    bytes_per_lane = max(1, C * itemsize)
    max_lanes = max(128, (_MAX_BLOCK_BYTES // bytes_per_lane) // 128 * 128)
    if HW <= max_lanes:
        tm, n_tiles = HW, 1                            # full-extent lane block (always legal)
    else:
        tm, n_tiles = max_lanes, pl.cdiv(HW, max_lanes)  # ragged last tile: masked / dropped writes
    row_bytes = C * tm * itemsize
    nb = 1
    for cand in range(min(N, _MAX_NB), 0, -1):         # largest divisor of N within the byte budget
        if N % cand == 0 and cand * row_bytes <= _MAX_BLOCK_BYTES:
            nb = cand
            break
    return nb, tm, n_tiles


def _moments(xf, pivot, nb, tm, n_tiles):
    N, C, HW = xf.shape
    n_bg = N // nb
    kernel = functools.partial(_moments_kernel, hw=HW, tm=tm, needs_mask=(HW % tm != 0))
    psum, pgram = pl.pallas_call(
        kernel,
        out_shape=(jax.ShapeDtypeStruct((n_bg, n_tiles, C, 1), jnp.float32),
                   jax.ShapeDtypeStruct((n_bg, n_tiles, C, C), jnp.float32)),
        grid_spec=pltpu.PrefetchScalarGridSpec(
            num_scalar_prefetch=0,
            grid=(n_bg, n_tiles),
            in_specs=[pl.BlockSpec((nb, C, tm), lambda g, t: (g, 0, t)),
                      pl.BlockSpec((C, 1), lambda g, t: (0, 0))],
            out_specs=[pl.BlockSpec((None, None, C, 1), lambda g, t: (g, t, 0, 0)),
                       pl.BlockSpec((None, None, C, C), lambda g, t: (g, t, 0, 0))],
        ),
        compiler_params=pltpu.CompilerParams(
            dimension_semantics=("parallel", "parallel"),
            vmem_limit_bytes=_VMEM_LIMIT_BYTES),
    )(xf, pivot.reshape(C, 1))
    # Tiny per-step partials; the cross-step reduction stays in plain JAX.  Every grid axis is
    # "parallel", so v7x megacore can split work regardless of N.
    return jnp.sum(psum, axis=(0, 1)), jnp.sum(pgram, axis=(0, 1))


def _whiten(xf, w_inv, beta_prime, nb, tm, n_tiles):
    N, C, HW = xf.shape
    n_bg = N // nb
    return pl.pallas_call(
        _whiten_kernel,
        out_shape=jax.ShapeDtypeStruct((N, C, HW), xf.dtype),
        grid_spec=pltpu.PrefetchScalarGridSpec(
            num_scalar_prefetch=0,
            grid=(n_bg, n_tiles),
            in_specs=[pl.BlockSpec((nb, C, tm), lambda g, t: (g, 0, t)),
                      pl.BlockSpec((C, C), lambda g, t: (0, 0)),
                      pl.BlockSpec((C, 1), lambda g, t: (0, 0))],
            out_specs=pl.BlockSpec((nb, C, tm), lambda g, t: (g, 0, t)),
        ),
        compiler_params=pltpu.CompilerParams(
            dimension_semantics=("parallel", "parallel"),
            vmem_limit_bytes=_VMEM_LIMIT_BYTES),
    )(xf, w_inv, beta_prime)


def bw_cholesky_block_full_diag_forward(x, running_mean, running_cov, beta,
                                        eps=1e-5, momentum=0.1, training=True):
    """Forward pass of BWCholeskyBlock_full_diag for 4D NCHW input.

    Returns (Y, new_running_mean, new_running_cov), matching the PyTorch
    training-mode (grad-enabled) semantics when training=True, and the
    eval-mode semantics otherwise.
    """
    N, C, H, W = x.shape
    HW = H * W
    M = N * HW
    xf = x.reshape(N, C, HW)                   # free view of NCHW, kept in its native dtype
    nb, tm, n_tiles = _choose_tiles(N, C, HW, jnp.dtype(x.dtype).itemsize)

    if training:
        # Pivot the moments around running_mean to avoid cancellation in the
        # uncentered covariance (mathematically identical result).
        pivot = running_mean.astype(jnp.float32)
        s, g = _moments(xf, pivot, nb, tm, n_tiles)       # (C, 1), (C, C)
        d = s[:, 0] / M                                   # batch_mean - pivot
        mean = pivot + d
        # torch.cov(correction=0) == E[(x-m)(x-m)^T]
        cov = g / M - jnp.outer(d, d) + eps * jnp.eye(C, dtype=jnp.float32)
        new_running_mean = (1.0 - momentum) * running_mean + momentum * mean
        new_running_cov = (1.0 - momentum) * running_cov + momentum * cov
        norm_mean = mean
    else:
        new_running_mean, new_running_cov = running_mean, running_cov
        norm_mean = running_mean.astype(jnp.float32)

    # TODO(synk): tiny CxC Cholesky + triangular inverse are inherently sequential and stay in
    # plain JAX (no Pallas/MXU benefit at this size).
    L = jnp.linalg.cholesky(new_running_cov.astype(jnp.float32))
    w_inv = jax.scipy.linalg.solve_triangular(
        L, jnp.eye(C, dtype=jnp.float32), lower=True)

    # Fold the mean subtraction into the bias:  y = W @ (x - mean) + beta = W @ x + (beta - W @ mean)
    beta_prime = beta.reshape(C, 1).astype(jnp.float32) - w_inv @ norm_mean.reshape(C, 1)

    yf = _whiten(xf, w_inv, beta_prime, nb, tm, n_tiles)   # (N, C, HW), same layout/dtype as x
    return yf.reshape(N, C, H, W), new_running_mean, new_running_cov


# ------------------------------ reference -----------------------------------

def _reference_forward(x, running_mean, running_cov, beta, eps=1e-5, momentum=0.1):
    N, C, H, W = x.shape
    xf = jnp.transpose(x, (1, 0, 2, 3)).reshape(C, -1)
    mean = jnp.mean(xf, axis=1)
    xc = xf - mean[:, None]
    cov = (xc @ xc.T) / xf.shape[1] + eps * jnp.eye(C)
    new_rc = (1.0 - momentum) * running_cov + momentum * cov
    new_rm = (1.0 - momentum) * running_mean + momentum * mean
    L = jnp.linalg.cholesky(new_rc)
    y = jax.scipy.linalg.solve_triangular(L, xc, lower=True)
    y = jnp.transpose(y.reshape(C, N, H, W), (1, 0, 2, 3)) + beta.reshape(1, C, 1, 1)
    return y, new_rm, new_rc


# --------------------------------- main --------------------------------------

if __name__ == "__main__":
    key = jax.random.PRNGKey(0)
    N, C, H, W = 2, 4, 16, 16

    x = jax.random.normal(key, (N, C, H, W), dtype=jnp.float32) * 2.0 + 0.5

    # Parameters / buffers exactly as in the module __init__ (deterministic).
    running_mean = jnp.zeros((C,), dtype=jnp.float32)
    running_cov = jnp.eye(C, dtype=jnp.float32)
    beta = jnp.zeros((C,), dtype=jnp.float32)   # nn.Parameter(torch.zeros(C))

    y, new_rm, new_rc = bw_cholesky_block_full_diag_forward(
        x, running_mean, running_cov, beta, eps=1e-5, momentum=0.1, training=True)
    y = jax.block_until_ready(y)

    y_ref, rm_ref, rc_ref = _reference_forward(x, running_mean, running_cov, beta)
    assert y.shape == (N, C, H, W)
    assert jnp.allclose(y, y_ref, atol=1e-4, rtol=1e-4)
    assert jnp.allclose(new_rm, rm_ref, atol=1e-5)
    assert jnp.allclose(new_rc, rc_ref, atol=1e-5)

    print("KERNEL_OK")
</pallas_src>

<mosaic_0001>
module attributes {stable_mosaic.version = 11 : i64} {
  func.func @_moments_kernel(%arg0: i32, %arg1: i32, %arg2: memref<2x4x256xf32, #tpu.memory_space<vmem>>, %arg3: memref<4x1xf32, #tpu.memory_space<vmem>>, %arg4: memref<1x1x4x1xf32, #tpu.memory_space<vmem>>, %arg5: memref<1x1x4x4xf32, #tpu.memory_space<vmem>>) attributes {dimension_semantics = [#tpu.dimension_semantics<parallel>, #tpu.dimension_semantics<parallel>], iteration_bounds = array<i64: 1, 1>, scalar_prefetch = 0 : i64, scratch_operands = 0 : i64, tpu.core_type = #tpu.core_type<tc>, window_params = [{transform_indices = @transform_0, window_bounds = array<i64: 2, 4, 256>}, {pipeline_mode = #tpu.pipeline_mode<synchronous>, transform_indices = @transform_1, window_bounds = array<i64: 4, 1>}, {transform_indices = @transform_2, window_bounds = array<i64: 1, 1, 4, 1>}, {transform_indices = @transform_3, window_bounds = array<i64: 1, 1, 4, 4>}]} {
    %c0 = arith.constant 0 : index
    %c0_0 = arith.constant 0 : index
    %c0_1 = arith.constant 0 : index
    %0 = vector.load %arg2[%c0, %c0_0, %c0_1] : memref<2x4x256xf32, #tpu.memory_space<vmem>>, vector<2x4x256xf32>
    %c0_2 = arith.constant 0 : index
    %c0_3 = arith.constant 0 : index
    %1 = vector.load %arg3[%c0_2, %c0_3] : memref<4x1xf32, #tpu.memory_space<vmem>>, vector<4x1xf32>
    %2 = vector.shape_cast %1 : vector<4x1xf32> to vector<1x4x1xf32>
    %3 = vector.broadcast %2 : vector<1x4x1xf32> to vector<2x4x256xf32>
    %4 = arith.subf %0, %3 : vector<2x4x256xf32>
    %cst = arith.constant dense<0.000000e+00> : vector<2x4xf32>
    %5 = vector.multi_reduction <add>, %4, %cst [2] : vector<2x4x256xf32> to vector<2x4xf32>
    %6 = vector.shape_cast %5 : vector<2x4xf32> to vector<2x4x1xf32>
    %cst_4 = arith.constant dense<0.000000e+00> : vector<4x1xf32>
    %7 = vector.multi_reduction <add>, %6, %cst_4 [0] : vector<2x4x1xf32> to vector<4x1xf32>
    %c0_5 = arith.constant 0 : index
    %c0_6 = arith.constant 0 : index
    %c0_7 = arith.constant 0 : index
    %c0_8 = arith.constant 0 : index
    %8 = vector.load %arg4[%c0_5, %c0_6, %c0_7, %c0_8] : memref<1x1x4x1xf32, #tpu.memory_space<vmem>>, vector<1x1x4x1xf32>
    %9 = vector.shape_cast %8 : vector<1x1x4x1xf32> to vector<4x1xf32>
    %10 = vector.shape_cast %7 : vector<4x1xf32> to vector<1x1x4x1xf32>
    tpu.vector_store %arg4[%c0_5, %c0_6, %c0_7, %c0_8], %10 {strides = array<i32>} : memref<1x1x4x1xf32, #tpu.memory_space<vmem>>, vector<1x1x4x1xf32>,
    %cst_9 = arith.constant dense<0.000000e+00> : vector<2x4x4xf32>
    %11 = tpu.matmul %4, %4, %cst_9 {dimension_numbers = #tpu.dot_dimension_numbers<[2], [2], [1], [1], [0, 0, 0, 1, 1, 1], [0], [0]>} : vector<2x4x256xf32>, vector<2x4x256xf32>, vector<2x4x4xf32> -> vector<2x4x4xf32>
    %cst_10 = arith.constant dense<0.000000e+00> : vector<4x4xf32>
    %12 = vector.multi_reduction <add>, %11, %cst_10 [0] : vector<2x4x4xf32> to vector<4x4xf32>
    %c0_11 = arith.constant 0 : index
    %c0_12 = arith.constant 0 : index
    %c0_13 = arith.constant 0 : index
    %c0_14 = arith.constant 0 : index
    %13 = vector.load %arg5[%c0_11, %c0_12, %c0_13, %c0_14] : memref<1x1x4x4xf32, #tpu.memory_space<vmem>>, vector<1x1x4x4xf32>
    %14 = vector.shape_cast %13 : vector<1x1x4x4xf32> to vector<4x4xf32>
    %15 = vector.shape_cast %12 : vector<4x4xf32> to vector<1x1x4x4xf32>
    tpu.vector_store %arg5[%c0_11, %c0_12, %c0_13, %c0_14], %15 {strides = array<i32>} : memref<1x1x4x4xf32, #tpu.memory_space<vmem>>, vector<1x1x4x4xf32>,
    return
  }
  func.func @transform_0(%arg0: i32, %arg1: i32) -> (i32, i32, i32) {
    %c0_i32 = arith.constant 0 : i32
    %c0_i32_0 = arith.constant 0 : i32
    return %arg0, %c0_i32, %arg1 : i32, i32, i32
  }
  func.func @transform_1(%arg0: i32, %arg1: i32) -> (i32, i32) {
    %c0_i32 = arith.constant 0 : i32
    %c0_i32_0 = arith.constant 0 : i32
    %c0_i32_1 = arith.constant 0 : i32
    return %c0_i32, %c0_i32_0 : i32, i32
  }
  func.func @transform_2(%arg0: i32, %arg1: i32) -> (i32, i32, i32, i32) {
    %c0_i32 = arith.constant 0 : i32
    %c0_i32_0 = arith.constant 0 : i32
    %c0_i32_1 = arith.constant 0 : i32
    return %arg0, %arg1, %c0_i32, %c0_i32_0 : i32, i32, i32, i32
  }
  func.func @transform_3(%arg0: i32, %arg1: i32) -> (i32, i32, i32, i32) {
    %c0_i32 = arith.constant 0 : i32
    %c0_i32_0 = arith.constant 0 : i32
    %c0_i32_1 = arith.constant 0 : i32
    return %arg0, %arg1, %c0_i32, %c0_i32_0 : i32, i32, i32, i32
  }
}

</mosaic_0001>

<llo_original>
// kernel: tpu_custom_call.1
$region0: #{tpu_custom_call.1}
  #allocation0 [shape = 'u32[]', space=smem, size = 0x4, offset = 0x4, fixed_abs, tag = 'smem constant byte address 0x4 - core index']
  #allocation1 [shape = 'u32[144,128]{1,0:T(1,128)}', space=vmem, size = 0x12000, scoped, tag = 'internal scratch']
  %s0 = inlined_call_operand.hbm [shape: f32[2,4,256], index: 0, kind: input, shape index: {}]
  %s1 = inlined_call_operand.vmem [shape: f32[4,1], index: 1, kind: input, shape index: {}]
  %s2 = inlined_call_operand.vmem [shape: f32[1,1,4,1], index: 2, kind: output, shape index: {0}]
  %s3 = inlined_call_operand.hbm [shape: f32[1,1,4,4], index: 3, kind: output, shape index: {1}]
  %4 = xla_tuple %s2, %s3
  %s5 = sld [smem:[#allocation0]]
  $region30: #{tpu_custom_call.1} parent=0
    _
  %s7 = ssub.s32 1, %s5
  %s8 = scalar_select 0, %s7, %s5
  $region1: #{tpu_custom_call.1} parent=0
    #allocation2 [shape = 'u8[8192]{0}', space=vmem, size = 0x2000, scoped, tag = 'input window, operand 0, single buffered']
    #allocation3 [shape = 's32[1]{0}', space=sflag, size = 0x4, scoped, tag = 'scoped memory for tpu_custom_call.1']
    #allocation4 [shape = 's32[1]{0}', space=sflag, size = 0x4, scoped, tag = 'scoped memory for tpu_custom_call.1']
    #allocation5 [shape = 'u8[2048]{0}', space=vmem, size = 0x800, scoped, tag = 'output window, operand 1, single buffered']
    %9 = vsyncpa [#allocation3], 0
    %10 = vsyncpa [#allocation4], 0
    // Predicated region
    $region2: #{tpu_custom_call.1} parent=1 // pred_check
      _
    $region3: #{tpu_custom_call.1} parent=1 // pred_check_branch
      %12 = sbr.rel (0) target = $region5
    $region4: #{tpu_custom_call.1} parent=1 // pred_region
      %s14 = ssub.s32 256, 256
      %15 = vsyncadd [#allocation3], %s14
      %s16 = sshll.u32 [#allocation2], 4
      %s17 = int_to_ptr.vmem [resolvable:$true] %s16
      %22 = dma.hbm_to_vmem [thread:$0]  %s0, 256, %s17, [#allocation3], 128, 128, 8
    $region5: #{tpu_custom_call.1} parent=1 // pred_fallthru
      _
    // Predicated region
    $region6: #{tpu_custom_call.1} parent=1 // pred_check
      _
    $region7: #{tpu_custom_call.1} parent=1 // pred_check_branch
      %24 = sbr.rel (0) target = $region9
    $region8: #{tpu_custom_call.1} parent=1 // pred_region
      _
    $region9: #{tpu_custom_call.1} parent=1 // pred_fallthru
      _
    // Predicated region
    $region10: #{tpu_custom_call.1} parent=1 // pred_check
      _
    $region11: #{tpu_custom_call.1} parent=1 // pred_check_branch
      %26 = sbr.rel (0) target = $region13
    $region12: #{tpu_custom_call.1} parent=1 // pred_region
      %27 = dma.done [#allocation3], 256
    $region13: #{tpu_custom_call.1} parent=1 // pred_fallthru
      _
    %v28 = vld [vmem:[#allocation2] sm:$0xff]
    %v29 = vld [vmem:[#allocation2 + $0x8] sm:$0xff]
    %v30 = vld [vmem:[%s1] sm:$0xf]
    %32 = vset.pattern.permute.xlu0 0
    %33 = vperm.xlu0 %32, %v30
    %v34 = vpop.permute.xlu0 %33
    %v36 = vunpack.c.l.s4 839922192
    %v37 = vunpack.c.0.s8 %v36
    %v38 = vlaneseq
    %v39 = vshrl.u32 %v38, 7
    %v40 = vsub.s32 %v37, %v39
    %v41 = vrot.slane %v34, %v40
    %v43 = vsub.f32 %v28, %v41
    %v44 = vsub.f32 %v29, %v41
    %v47 = vcombine.high %v43, %v43
    %v48 = vcombine.high %v44, %v44
    %vm51 = vcmask 1043456
    %v52 = vsel %vm51, %v43, 0.0
    %v53 = vsel %vm51, %v47, 0.0
    %v54 = vadd.f32 %v52, %v53
    %55 = vadd.xlane.f32.xlu0 %v54
    %v56 = vpop.xlane.xlu0 %55
    %v57 = vsel %vm51, %v44, 0.0
    %v58 = vsel %vm51, %v48, 0.0
    %v59 = vadd.f32 %v57, %v58
    %60 = vadd.xlane.f32.xlu0 %v59
    %v61 = vpop.xlane.xlu0 %60
    %v62 = vsel %vm51, %v56, 0.0
    %v63 = vsel %vm51, %v61, 0.0
    %v64 = vadd.f32 %v62, %v63
    %vm65 = vcmask 3072
    %66 = vst.msk [vmem:[%s2] sm:$0xf] %vm65, %v64
    %67 = vmatprep.subr.mxu0 0.0
    %68 = vmatpush1.xpose.msra.mxu0 0.0
    %69 = vmatprep.subr.mxu0 0.0
    %70 = vmatpush1.xpose.msra.mxu0 0.0
    %71 = vmatprep.subr.mxu0 0.0
    %72 = vmatpush1.xpose.msra.mxu0 0.0
    %73 = vmatprep.subr.mxu0 0.0
    %74 = vmatpush1.xpose.msra.mxu0 0.0
    %75 = vmatprep.subr.mxu0 0.0
    %76 = vmatpush1.xpose.msra.mxu0 0.0
    %77 = vmatprep.subr.mxu0 0.0
    %78 = vmatpush1.xpose.msra.mxu0 0.0
    %79 = vmatprep.subr.mxu0 0.0
    %80 = vmatpush1.xpose.msra.mxu0 0.0
    %81 = vmatprep.subr.mxu0 0.0
    %82 = vmatpush1.xpose.msra.mxu0 0.0
    %83 = vmatprep.subr.mxu0 0.0
    %84 = vmatpush1.xpose.msra.mxu0 0.0
    %85 = vmatprep.subr.mxu0 0.0
    %86 = vmatpush1.xpose.msra.mxu0 0.0
    %87 = vmatprep.subr.mxu0 0.0
    %88 = vmatpush1.xpose.msra.mxu0 0.0
    %89 = vmatprep.subr.mxu0 0.0
    %90 = vmatpush1.xpose.msra.mxu0 0.0
    %91 = vmatprep.subr.mxu0 0.0
    %92 = vmatpush1.xpose.msra.mxu0 0.0
    %93 = vmatprep.subr.mxu0 0.0
    %94 = vmatpush1.xpose.msra.mxu0 0.0
    %95 = vmatprep.subr.mxu0 0.0
    %96 = vmatpush1.xpose.msra.mxu0 0.0
    %97 = vmatprep.subr.mxu0 %v47
    %98 = vmatpush1.xpose.msra.mxu0 %v43
    %99 = vmatprep.subr.mxu0 0.0
    %100 = vmatpush2.xpose.msra.mxu0 0.0
    %101 = vmatprep.subr.mxu0 0.0
    %102 = vmatpush2.xpose.msra.mxu0 0.0
    %103 = vmatprep.subr.mxu0 0.0
    %104 = vmatpush2.xpose.msra.mxu0 0.0
    %105 = vmatprep.subr.mxu0 0.0
    %106 = vmatpush2.xpose.msra.mxu0 0.0
    %107 = vmatprep.subr.mxu0 0.0
    %108 = vmatpush2.xpose.msra.mxu0 0.0
    %109 = vmatprep.subr.mxu0 0.0
    %110 = vmatpush2.xpose.msra.mxu0 0.0
    %111 = vmatprep.subr.mxu0 0.0
    %112 = vmatpush2.xpose.msra.mxu0 0.0
    %113 = vmatprep.subr.mxu0 0.0
    %114 = vmatpush2.xpose.msra.mxu0 0.0
    %115 = vmatprep.subr.mxu0 0.0
    %116 = vmatpush2.xpose.msra.mxu0 0.0
    %117 = vmatprep.subr.mxu0 0.0
    %118 = vmatpush2.xpose.msra.mxu0 0.0
    %119 = vmatprep.subr.mxu0 0.0
    %120 = vmatpush2.xpose.msra.mxu0 0.0
    %121 = vmatprep.subr.mxu0 0.0
    %122 = vmatpush2.xpose.msra.mxu0 0.0
    %123 = vmatprep.subr.mxu0 0.0
    %124 = vmatpush2.xpose.msra.mxu0 0.0
    %125 = vmatprep.subr.mxu0 0.0
    %126 = vmatpush2.xpose.msra.mxu0 0.0
    %127 = vmatprep.subr.mxu0 0.0
    %128 = vmatpush2.xpose.msra.mxu0 0.0
    %129 = vmatprep.subr.mxu0 0.0
    %130 = vmatpush2.xpose.msra.mxu0 0.0
    %131 = vmatprep.mubr.f32.mxu0 %v47
    %132 = vmatmul.mubr.f32.gmra.mxu0 %v43
    %v133 = vpop.f32.mrf.mxu0
    %v134 = vadd.f32 0.0, %v133
    %v135 = vpop.f32.mrf.mxu0
    %136 = vdwg.mxu0
    %137 = vmatprep.subr.mxu0 0.0
    %138 = vmatpush1.xpose.msra.mxu0 0.0
    %139 = vmatprep.subr.mxu0 0.0
    %140 = vmatpush1.xpose.msra.mxu0 0.0
    %141 = vmatprep.subr.mxu0 0.0
    %142 = vmatpush1.xpose.msra.mxu0 0.0
    %143 = vmatprep.subr.mxu0 0.0
    %144 = vmatpush1.xpose.msra.mxu0 0.0
    %145 = vmatprep.subr.mxu0 0.0
    %146 = vmatpush1.xpose.msra.mxu0 0.0
    %147 = vmatprep.subr.mxu0 0.0
    %148 = vmatpush1.xpose.msra.mxu0 0.0
    %149 = vmatprep.subr.mxu0 0.0
    %150 = vmatpush1.xpose.msra.mxu0 0.0
    %151 = vmatprep.subr.mxu0 0.0
    %152 = vmatpush1.xpose.msra.mxu0 0.0
    %153 = vmatprep.subr.mxu0 0.0
    %154 = vmatpush1.xpose.msra.mxu0 0.0
    %155 = vmatprep.subr.mxu0 0.0
    %156 = vmatpush1.xpose.msra.mxu0 0.0
    %157 = vmatprep.subr.mxu0 0.0
    %158 = vmatpush1.xpose.msra.mxu0 0.0
    %159 = vmatprep.subr.mxu0 0.0
    %160 = vmatpush1.xpose.msra.mxu0 0.0
    %161 = vmatprep.subr.mxu0 0.0
    %162 = vmatpush1.xpose.msra.mxu0 0.0
    %163 = vmatprep.subr.mxu0 0.0
    %164 = vmatpush1.xpose.msra.mxu0 0.0
    %165 = vmatprep.subr.mxu0 0.0
    %166 = vmatpush1.xpose.msra.mxu0 0.0
    %167 = vmatprep.subr.mxu0 %v48
    %168 = vmatpush1.xpose.msra.mxu0 %v44
    %169 = vmatprep.subr.mxu0 0.0
    %170 = vmatpush2.xpose.msra.mxu0 0.0
    %171 = vmatprep.subr.mxu0 0.0
    %172 = vmatpush2.xpose.msra.mxu0 0.0
    %173 = vmatprep.subr.mxu0 0.0
    %174 = vmatpush2.xpose.msra.mxu0 0.0
    %175 = vmatprep.subr.mxu0 0.0
    %176 = vmatpush2.xpose.msra.mxu0 0.0
    %177 = vmatprep.subr.mxu0 0.0
    %178 = vmatpush2.xpose.msra.mxu0 0.0
    %179 = vmatprep.subr.mxu0 0.0
    %180 = vmatpush2.xpose.msra.mxu0 0.0
    %181 = vmatprep.subr.mxu0 0.0
    %182 = vmatpush2.xpose.msra.mxu0 0.0
    %183 = vmatprep.subr.mxu0 0.0
    %184 = vmatpush2.xpose.msra.mxu0 0.0
    %185 = vmatprep.subr.mxu0 0.0
    %186 = vmatpush2.xpose.msra.mxu0 0.0
    %187 = vmatprep.subr.mxu0 0.0
    %188 = vmatpush2.xpose.msra.mxu0 0.0
    %189 = vmatprep.subr.mxu0 0.0
    %190 = vmatpush2.xpose.msra.mxu0 0.0
    %191 = vmatprep.subr.mxu0 0.0
    %192 = vmatpush2.xpose.msra.mxu0 0.0
    %193 = vmatprep.subr.mxu0 0.0
    %194 = vmatpush2.xpose.msra.mxu0 0.0
    %195 = vmatprep.subr.mxu0 0.0
    %196 = vmatpush2.xpose.msra.mxu0 0.0
    %197 = vmatprep.subr.mxu0 0.0
    %198 = vmatpush2.xpose.msra.mxu0 0.0
    %199 = vmatprep.subr.mxu0 0.0
    %200 = vmatpush2.xpose.msra.mxu0 0.0
    %201 = vmatprep.mubr.f32.mxu0 %v48
    %202 = vmatmul.mubr.f32.gmra.mxu0 %v44
    %v203 = vpop.f32.mrf.mxu0
    %v204 = vadd.f32 0.0, %v203
    %v205 = vpop.f32.mrf.mxu0
    %206 = vdwg.mxu0
    %vm207 = vcmask 27648
    %v208 = vsel %vm207, %v134, 0.0
    %v209 = vsel %vm207, %v204, 0.0
    %v210 = vadd.f32 %v208, %v209
    %211 = vst.msk [vmem:[#allocation5] sm:$0xf] %vm207, %v210
    // Predicated region
    $region14: #{tpu_custom_call.1} parent=1 // pred_check
      _
    $region15: #{tpu_custom_call.1} parent=1 // pred_check_branch
      %213 = sbr.rel (0) target = $region17
    $region16: #{tpu_custom_call.1} parent=1 // pred_region
      _
    $region17: #{tpu_custom_call.1} parent=1 // pred_fallthru
      _
    // Predicated region
    $region18: #{tpu_custom_call.1} parent=1 // pred_check
      _
    $region19: #{tpu_custom_call.1} parent=1 // pred_check_branch
      %215 = sbr.rel (0) target = $region21
    $region20: #{tpu_custom_call.1} parent=1 // pred_region
      %s217 = ssub.s32 64, 64
      %218 = vsyncadd [#allocation4], %s217
      %s220 = sshll.u32 [#allocation5], 4
      %s221 = int_to_ptr.vmem [resolvable:$true] %s220
      %223 = dma.vmem_to_hbm [thread:$0]  %s221, 64, %s3, [#allocation4]
    $region21: #{tpu_custom_call.1} parent=1 // pred_fallthru
      _
    // Predicated region
    $region22: #{tpu_custom_call.1} parent=1 // pred_check
      _
    $region23: #{tpu_custom_call.1} parent=1 // pred_check_branch
      %225 = sbr.rel (0) target = $region25
    $region24: #{tpu_custom_call.1} parent=1 // pred_region
      _
    $region25: #{tpu_custom_call.1} parent=1 // pred_fallthru
      _
    // Predicated region
    $region26: #{tpu_custom_call.1} parent=1 // pred_check
      _
    $region27: #{tpu_custom_call.1} parent=1 // pred_check_branch
      %227 = sbr.rel (0) target = $region29
    $region28: #{tpu_custom_call.1} parent=1 // pred_region
      %228 = dma.done [#allocation4], 64
    $region29: #{tpu_custom_call.1} parent=1 // pred_fallthru
      _
    %229 = vsyncpa [#allocation3], 1
    %230 = vsyncpa [#allocation4], 1

</llo_original>
